<compile_context>
chip_gen: v5e
topology: v5e:2x2
jax: 0.10.0
libtpu: 0.0.40
codegen_flags: <defaults>
</compile_context>

<pallas_src>
import functools

import jax
import jax.numpy as jnp
from jax.experimental import pallas as pl
from jax.experimental.pallas import tpu as pltpu

HIDDEN = 100            # logical hidden size of fc1 (as in the PyTorch module)
H_PAD = 128             # hidden padded to one full lane vreg
HEAD_LANES = 128        # fused head lanes (policy lanes 0..A-1, value lane A, rest zero)
MATMUL_PRECISION = jax.lax.Precision.HIGHEST   # f32-faithful; tiny model, negligible cost


def policy_net_kernel(x_ref, w1_ref, b1_ref, wh_ref, bh_ref, pol_ref, val_ref, *, num_actions):
    A = num_actions
    x = x_ref[...]                                                    # (tb, A)

    # fc1 + ReLU (hidden padded 100 -> 128; padded lanes are exactly 0 through the ReLU)
    h = jnp.dot(x, w1_ref[...], precision=MATMUL_PRECISION,
                preferred_element_type=jnp.float32) + b1_ref[...]
    h = jnp.maximum(h, 0.0)                                           # (tb, 128)

    # fused heads: one (tb,128) @ (128,128) matmul; lane A carries the value head
    z = jnp.dot(h, wh_ref[...], precision=MATMUL_PRECISION,
                preferred_element_type=jnp.float32) + bh_ref[...]     # (tb, 128)

    # softmax over the first A lanes only; padded lanes (incl. value lane A) masked to -inf.
    # NOTE: do not unmask lane A — it would corrupt the softmax max/sum.
    lane = jax.lax.broadcasted_iota(jnp.int32, (1, HEAD_LANES), 1)    # (1,128), broadcasts
    is_policy = lane < A
    logits = jnp.where(is_policy, z, -jnp.inf)
    m = jnp.max(logits, axis=-1, keepdims=True)
    e = jnp.exp(logits - m)                                           # exp(-inf)=0 on masked lanes
    s = jnp.sum(e, axis=-1, keepdims=True)
    probs = e * pl.reciprocal(s)                                      # EXACT reciprocal (column only)

    # narrow stores: only the useful lanes hit HBM (policy A lanes, value 1 lane)
    pol_ref[...] = probs[:, :A]                                       # (tb, A)
    val_ref[...] = z[:, A:A + 1]                                      # (tb, 1)


def pack_params(w1, b1, wp, bp, wv, bv, num_actions):
    """Pad hidden to 128 and fuse the two heads (+ their biases) into one (128,128) weight."""
    assert num_actions + 1 <= HEAD_LANES, "num_actions too large for one fused head tile"
    A = num_actions
    w1_p = jnp.zeros((A, H_PAD), jnp.float32).at[:, :HIDDEN].set(w1)
    b1_p = jnp.zeros((1, H_PAD), jnp.float32).at[:, :HIDDEN].set(b1.reshape(1, HIDDEN))

    wh = jnp.zeros((H_PAD, HEAD_LANES), jnp.float32)
    wh = wh.at[:HIDDEN, :A].set(wp)
    wh = wh.at[:HIDDEN, A].set(wv.reshape(HIDDEN))

    bh = jnp.zeros((1, HEAD_LANES), jnp.float32)
    bh = bh.at[0, :A].set(bp.reshape(A))
    bh = bh.at[0, A].set(bv.reshape(()))
    return w1_p, b1_p, wh, bh


def _round_up(x, m):
    return ((x + m - 1) // m) * m


def _num_tensorcores_per_chip():
    """Best-effort: v7x has 2 TensorCores/chip; both are only used if the parallel grid has >=2 steps."""
    try:
        kind = jax.devices()[0].device_kind.lower()
    except Exception:
        return 1
    return 2 if ("v7" in kind or "7x" in kind) else 1


def policy_net_forward(x, packed_params, num_actions, *, tile_b=2048):
    """x: (B, num_actions) f32.  Returns (policy (B, A) f32, value (B, 1) f32)."""
    w1_p, b1_p, wh, bh = packed_params
    B, A = x.shape
    assert A == num_actions
    Hp = w1_p.shape[1]
    L = wh.shape[1]

    # Batch tiling: large tiles to amortize per-grid-step overhead; tb=2048 keeps f32
    # intermediates (~11 MiB incl. double buffers) inside v5e's 16 MiB scoped-VMEM default.
    b8 = _round_up(B, 8)
    tb_cap = max(8, _round_up(min(tile_b, b8), 8))
    n_cores = _num_tensorcores_per_chip()
    min_steps = n_cores if b8 >= 8 * n_cores else 1        # give both v7x cores a tile
    tb = min(tb_cap, _round_up(pl.cdiv(b8, min_steps), 8))
    Bp = _round_up(b8, tb)
    if Bp != B:
        x = jnp.pad(x, ((0, Bp - B), (0, 0)))

    kernel = functools.partial(policy_net_kernel, num_actions=num_actions)
    policy, value = pl.pallas_call(
        kernel,
        out_shape=(jax.ShapeDtypeStruct((Bp, A), jnp.float32),
                   jax.ShapeDtypeStruct((Bp, 1), jnp.float32)),
        grid=(Bp // tb,),
        in_specs=[
            pl.BlockSpec((tb, A), lambda i: (i, 0)),        # x tiles over batch
            pl.BlockSpec((A, Hp), lambda i: (0, 0)),        # weights stay VMEM-resident
            pl.BlockSpec((1, Hp), lambda i: (0, 0)),
            pl.BlockSpec((Hp, L), lambda i: (0, 0)),
            pl.BlockSpec((1, L), lambda i: (0, 0)),
        ],
        out_specs=(pl.BlockSpec((tb, A), lambda i: (i, 0)),
                   pl.BlockSpec((tb, 1), lambda i: (i, 0))),
        compiler_params=pltpu.CompilerParams(dimension_semantics=("parallel",)),
    )(x, w1_p, b1_p, wh, bh)

    return policy[:B], value[:B]


def init_params(key, num_actions, hidden=HIDDEN):
    """Deterministic init mimicking PyTorch nn.Linear defaults
    (uniform(-1/sqrt(fan_in), 1/sqrt(fan_in)))."""
    k1, k2, k3, k4, k5, k6 = jax.random.split(key, 6)

    def u(k, shape, fan_in):
        bound = 1.0 / jnp.sqrt(jnp.asarray(fan_in, jnp.float32))
        return jax.random.uniform(k, shape, jnp.float32, -bound, bound)

    # stored as (in_features, out_features) so the kernel does x @ W
    w1 = u(k1, (num_actions, hidden), num_actions)
    b1 = u(k2, (hidden,), num_actions)
    wp = u(k3, (hidden, num_actions), hidden)
    bp = u(k4, (num_actions,), hidden)
    wv = u(k5, (hidden, 1), hidden)
    bv = u(k6, (1,), hidden)
    return w1, b1, wp, bp, wv, bv


if __name__ == "__main__":
    num_actions = 4
    batch = 8

    key = jax.random.PRNGKey(0)
    kx, kp = jax.random.split(key)
    x = jax.random.normal(kx, (batch, num_actions), jnp.float32)
    raw = init_params(kp, num_actions)
    packed = pack_params(*raw, num_actions=num_actions)

    policy, value = policy_net_forward(x, packed, num_actions)
    jax.block_until_ready((policy, value))

    # sanity check against a pure-JAX reference (unpadded, unfused), same matmul precision
    w1, b1, wp, bp, wv, bv = raw
    hi = MATMUL_PRECISION
    h_ref = jnp.maximum(jnp.dot(x, w1, precision=hi) + b1, 0.0)
    policy_ref = jax.nn.softmax(jnp.dot(h_ref, wp, precision=hi) + bp, axis=-1)
    value_ref = jnp.dot(h_ref, wv, precision=hi) + bv

    assert policy.shape == (batch, num_actions) and value.shape == (batch, 1)
    # exact normalization now -> rows sum to 1 up to f32 rounding
    assert jnp.allclose(jnp.sum(policy, axis=-1), 1.0, atol=1e-4), "policy rows do not sum to 1"
    # tolerances left loose enough to also cover default-precision MXU paths
    assert jnp.allclose(policy, policy_ref, atol=1e-2, rtol=1e-2), "policy mismatch"
    assert jnp.allclose(value, value_ref, atol=1e-2, rtol=1e-2), "value mismatch"

    print("KERNEL_OK")
</pallas_src>

<mosaic_0001>
module attributes {stable_mosaic.version = 11 : i64} {
  func.func @policy_net_kernel(%arg0: i32, %arg1: memref<8x4xf32, #tpu.memory_space<vmem>>, %arg2: memref<4x128xf32, #tpu.memory_space<vmem>>, %arg3: memref<1x128xf32, #tpu.memory_space<vmem>>, %arg4: memref<128x128xf32, #tpu.memory_space<vmem>>, %arg5: memref<1x128xf32, #tpu.memory_space<vmem>>, %arg6: memref<8x4xf32, #tpu.memory_space<vmem>>, %arg7: memref<8x1xf32, #tpu.memory_space<vmem>>) attributes {dimension_semantics = [#tpu.dimension_semantics<parallel>], iteration_bounds = array<i64: 1>, scalar_prefetch = 0 : i64, scratch_operands = 0 : i64, tpu.core_type = #tpu.core_type<tc>, window_params = [{transform_indices = @transform_0, window_bounds = array<i64: 8, 4>}, {pipeline_mode = #tpu.pipeline_mode<synchronous>, transform_indices = @transform_1, window_bounds = array<i64: 4, 128>}, {pipeline_mode = #tpu.pipeline_mode<synchronous>, transform_indices = @transform_2, window_bounds = array<i64: 1, 128>}, {pipeline_mode = #tpu.pipeline_mode<synchronous>, transform_indices = @transform_3, window_bounds = array<i64: 128, 128>}, {pipeline_mode = #tpu.pipeline_mode<synchronous>, transform_indices = @transform_4, window_bounds = array<i64: 1, 128>}, {transform_indices = @transform_5, window_bounds = array<i64: 8, 4>}, {transform_indices = @transform_6, window_bounds = array<i64: 8, 1>}]} {
    %c0 = arith.constant 0 : index
    %c0_0 = arith.constant 0 : index
    %0 = vector.load %arg1[%c0, %c0_0] : memref<8x4xf32, #tpu.memory_space<vmem>>, vector<8x4xf32>
    %c0_1 = arith.constant 0 : index
    %c0_2 = arith.constant 0 : index
    %1 = vector.load %arg2[%c0_1, %c0_2] : memref<4x128xf32, #tpu.memory_space<vmem>>, vector<4x128xf32>
    %cst = arith.constant dense<0.000000e+00> : vector<8x128xf32>
    %2 = tpu.matmul %0, %1, %cst {dimension_numbers = #tpu.dot_dimension_numbers<[1], [0], [0], [1], [0, 0, 1, 1], [], []>, precision = #tpu.contract_precision<fp32>} : vector<8x4xf32>, vector<4x128xf32>, vector<8x128xf32> -> vector<8x128xf32>
    %c0_3 = arith.constant 0 : index
    %c0_4 = arith.constant 0 : index
    %3 = vector.load %arg3[%c0_3, %c0_4] : memref<1x128xf32, #tpu.memory_space<vmem>>, vector<1x128xf32>
    %4 = vector.broadcast %3 : vector<1x128xf32> to vector<8x128xf32>
    %5 = arith.addf %2, %4 : vector<8x128xf32>
    %cst_5 = arith.constant 0.000000e+00 : f32
    %6 = vector.broadcast %cst_5 : f32 to vector<8x128xf32>
    %7 = arith.maximumf %5, %6 : vector<8x128xf32>
    %c0_6 = arith.constant 0 : index
    %c0_7 = arith.constant 0 : index
    %8 = vector.load %arg4[%c0_6, %c0_7] : memref<128x128xf32, #tpu.memory_space<vmem>>, vector<128x128xf32>
    %cst_8 = arith.constant dense<0.000000e+00> : vector<8x128xf32>
    %9 = tpu.matmul %7, %8, %cst_8 {dimension_numbers = #tpu.dot_dimension_numbers<[1], [0], [0], [1], [0, 0, 1, 1], [], []>, precision = #tpu.contract_precision<fp32>} : vector<8x128xf32>, vector<128x128xf32>, vector<8x128xf32> -> vector<8x128xf32>
    %c0_9 = arith.constant 0 : index
    %c0_10 = arith.constant 0 : index
    %10 = vector.load %arg5[%c0_9, %c0_10] : memref<1x128xf32, #tpu.memory_space<vmem>>, vector<1x128xf32>
    %11 = vector.broadcast %10 : vector<1x128xf32> to vector<8x128xf32>
    %12 = arith.addf %9, %11 : vector<8x128xf32>
    %13 = tpu.iota {dimensions = array<i32: 1>} : vector<1x128xi32>
    %c4_i32 = arith.constant 4 : i32
    %14 = vector.broadcast %c4_i32 : i32 to vector<1x128xi32>
    %15 = arith.cmpi slt, %13, %14 : vector<1x128xi32>
    %cst_11 = arith.constant 0xFF800000 : f32
    %16 = vector.shape_cast %15 : vector<1x128xi1> to vector<1x128xi1>
    %17 = vector.broadcast %16 : vector<1x128xi1> to vector<8x128xi1>
    %18 = vector.broadcast %cst_11 : f32 to vector<8x128xf32>
    %19 = arith.select %17, %12, %18 : vector<8x128xi1>, vector<8x128xf32>
    %cst_12 = arith.constant dense<0xFF800000> : vector<8xf32>
    %20 = vector.multi_reduction <maximumf>, %19, %cst_12 [1] : vector<8x128xf32> to vector<8xf32>
    %21 = vector.shape_cast %20 : vector<8xf32> to vector<8x1xf32>
    %22 = vector.broadcast %21 : vector<8x1xf32> to vector<8x128xf32>
    %23 = arith.subf %19, %22 : vector<8x128xf32>
    %24 = math.exp %23 : vector<8x128xf32>
    %cst_13 = arith.constant dense<0.000000e+00> : vector<8xf32>
    %25 = vector.multi_reduction <add>, %24, %cst_13 [1] : vector<8x128xf32> to vector<8xf32>
    %26 = vector.shape_cast %25 : vector<8xf32> to vector<8x1xf32>
    %27 = tpu.reciprocal %26 : vector<8x1xf32> -> vector<8x1xf32>
    %28 = vector.broadcast %27 : vector<8x1xf32> to vector<8x128xf32>
    %29 = arith.mulf %24, %28 : vector<8x128xf32>
    %30 = vector.extract_strided_slice %29 {offsets = [0, 0], sizes = [8, 4], strides = [1, 1]} : vector<8x128xf32> to vector<8x4xf32>
    %c0_14 = arith.constant 0 : index
    %c0_15 = arith.constant 0 : index
    %31 = vector.load %arg6[%c0_14, %c0_15] : memref<8x4xf32, #tpu.memory_space<vmem>>, vector<8x4xf32>
    tpu.vector_store %arg6[%c0_14, %c0_15], %30 {strides = array<i32>} : memref<8x4xf32, #tpu.memory_space<vmem>>, vector<8x4xf32>,
    %32 = vector.extract_strided_slice %12 {offsets = [0, 4], sizes = [8, 1], strides = [1, 1]} : vector<8x128xf32> to vector<8x1xf32>
    %c0_16 = arith.constant 0 : index
    %c0_17 = arith.constant 0 : index
    %33 = vector.load %arg7[%c0_16, %c0_17] : memref<8x1xf32, #tpu.memory_space<vmem>>, vector<8x1xf32>
    tpu.vector_store %arg7[%c0_16, %c0_17], %32 {strides = array<i32>} : memref<8x1xf32, #tpu.memory_space<vmem>>, vector<8x1xf32>,
    return
  }
  func.func @transform_0(%arg0: i32) -> (i32, i32) {
    %c0_i32 = arith.constant 0 : i32
    %c0_i32_0 = arith.constant 0 : i32
    return %arg0, %c0_i32 : i32, i32
  }
  func.func @transform_1(%arg0: i32) -> (i32, i32) {
    %c0_i32 = arith.constant 0 : i32
    %c0_i32_0 = arith.constant 0 : i32
    %c0_i32_1 = arith.constant 0 : i32
    return %c0_i32, %c0_i32_0 : i32, i32
  }
  func.func @transform_2(%arg0: i32) -> (i32, i32) {
    %c0_i32 = arith.constant 0 : i32
    %c0_i32_0 = arith.constant 0 : i32
    %c0_i32_1 = arith.constant 0 : i32
    return %c0_i32, %c0_i32_0 : i32, i32
  }
  func.func @transform_3(%arg0: i32) -> (i32, i32) {
    %c0_i32 = arith.constant 0 : i32
    %c0_i32_0 = arith.constant 0 : i32
    %c0_i32_1 = arith.constant 0 : i32
    return %c0_i32, %c0_i32_0 : i32, i32
  }
  func.func @transform_4(%arg0: i32) -> (i32, i32) {
    %c0_i32 = arith.constant 0 : i32
    %c0_i32_0 = arith.constant 0 : i32
    %c0_i32_1 = arith.constant 0 : i32
    return %c0_i32, %c0_i32_0 : i32, i32
  }
  func.func @transform_5(%arg0: i32) -> (i32, i32) {
    %c0_i32 = arith.constant 0 : i32
    %c0_i32_0 = arith.constant 0 : i32
    return %arg0, %c0_i32 : i32, i32
  }
  func.func @transform_6(%arg0: i32) -> (i32, i32) {
    %c0_i32 = arith.constant 0 : i32
    %c0_i32_0 = arith.constant 0 : i32
    return %arg0, %c0_i32 : i32, i32
  }
}

</mosaic_0001>

<llo_original>
// kernel: tpu_custom_call.1
$region0: #{tpu_custom_call.1}
  #allocation0 [shape = 'u32[]', space=smem, size = 0x4, offset = 0x4, fixed_abs, tag = 'smem constant byte address 0x4 - core index']
  #allocation1 [shape = 'u32[72,128]{1,0:T(1,128)}', space=vmem, size = 0x9000, scoped, tag = 'internal scratch']
  %s0 = inlined_call_operand.vmem [shape: f32[8,4], index: 0, kind: input, shape index: {}]
  %s1 = inlined_call_operand.vmem [shape: f32[4,128], index: 1, kind: input, shape index: {}]
  %s2 = inlined_call_operand.vmem [shape: f32[1,128], index: 2, kind: input, shape index: {}]
  %s3 = inlined_call_operand.hbm [shape: f32[128,128], index: 3, kind: input, shape index: {}]
  %s4 = inlined_call_operand.vmem [shape: f32[1,128], index: 4, kind: input, shape index: {}]
  %s5 = inlined_call_operand.vmem [shape: f32[8,4], index: 5, kind: output, shape index: {0}]
  %s6 = inlined_call_operand.vmem [shape: f32[8,1], index: 6, kind: output, shape index: {1}]
  %7 = xla_tuple %s5, %s6
  %s8 = sld [smem:[#allocation0]]
  $region42: #{tpu_custom_call.1} parent=0
    _
  %s10 = ssub.s32 1, %s8
  %s11 = scalar_select 0, %s10, %s8
  $region1: #{tpu_custom_call.1} parent=0
    #allocation2 [shape = 'u8[65536]{0}', space=vmem, size = 0x10000, scoped, tag = 'input window, operand 3, single buffered']
    #allocation3 [shape = 's32[1]{0}', space=sflag, size = 0x4, scoped, tag = 'scoped memory for tpu_custom_call.1']
    %12 = vsyncpa [#allocation3], 0
    // Predicated region
    $region2: #{tpu_custom_call.1} parent=1 // pred_check
      _
    $region3: #{tpu_custom_call.1} parent=1 // pred_check_branch
      %14 = sbr.rel (0) target = $region5
    $region4: #{tpu_custom_call.1} parent=1 // pred_region
      _
    $region5: #{tpu_custom_call.1} parent=1 // pred_fallthru
      _
    // Predicated region
    $region6: #{tpu_custom_call.1} parent=1 // pred_check
      _
    $region7: #{tpu_custom_call.1} parent=1 // pred_check_branch
      %16 = sbr.rel (0) target = $region9
    $region8: #{tpu_custom_call.1} parent=1 // pred_region
      _
    $region9: #{tpu_custom_call.1} parent=1 // pred_fallthru
      _
    // Predicated region
    $region10: #{tpu_custom_call.1} parent=1 // pred_check
      _
    $region11: #{tpu_custom_call.1} parent=1 // pred_check_branch
      %18 = sbr.rel (0) target = $region13
    $region12: #{tpu_custom_call.1} parent=1 // pred_region
      _
    $region13: #{tpu_custom_call.1} parent=1 // pred_fallthru
      _
    // Predicated region
    $region14: #{tpu_custom_call.1} parent=1 // pred_check
      _
    $region15: #{tpu_custom_call.1} parent=1 // pred_check_branch
      %20 = sbr.rel (0) target = $region17
    $region16: #{tpu_custom_call.1} parent=1 // pred_region
      %22 = vsyncadd [#allocation3], 0
      %s23 = sshll.u32 %s3, 4
      %s24 = int_to_ptr.hbm [resolvable:$true] %s23
      %s25 = sshll.u32 [#allocation2], 4
      %s26 = int_to_ptr.vmem [resolvable:$true] %s25
      %31 = dma.hbm_to_vmem [thread:$0]  %s24, 2048, %s26, [#allocation3], 128, 128, 8
    $region17: #{tpu_custom_call.1} parent=1 // pred_fallthru
      _
    // Predicated region
    $region18: #{tpu_custom_call.1} parent=1 // pred_check
      _
    $region19: #{tpu_custom_call.1} parent=1 // pred_check_branch
      %33 = sbr.rel (0) target = $region21
    $region20: #{tpu_custom_call.1} parent=1 // pred_region
      _
    $region21: #{tpu_custom_call.1} parent=1 // pred_fallthru
      _
    // Predicated region
    $region22: #{tpu_custom_call.1} parent=1 // pred_check
      _
    $region23: #{tpu_custom_call.1} parent=1 // pred_check_branch
      %35 = sbr.rel (0) target = $region25
    $region24: #{tpu_custom_call.1} parent=1 // pred_region
      %37 = dma.done [#allocation3], 2048
    $region25: #{tpu_custom_call.1} parent=1 // pred_fallthru
      _
    %v38 = vld [vmem:[%s0] sm:$0xff]
    %v39 = vld [vmem:[%s1] sm:$0xf]
    %v40 = vld [vmem:[%s2] sm:$0x1]
    %v42 = vperm.slane %v40, 0
    %vm44 = vcmask 31744
    %v46 = vsel %vm44, %v38, 0
    %vm48 = vcmask 1043456
    %v50 = vsel %vm48, %v39, 0
    %52 = vmatpush.msra.mxu0 0.0
    %53 = vmatpush.msra.mxu0 0.0
    %54 = vmatpush.msra.mxu0 0.0
    %55 = vmatpush.msra.mxu0 0.0
    %56 = vmatpush.msra.mxu0 0.0
    %57 = vmatpush.msra.mxu0 0.0
    %58 = vmatpush.msra.mxu0 0.0
    %59 = vmatpush.msra.mxu0 0.0
    %60 = vmatpush.msra.mxu0 0.0
    %61 = vmatpush.msra.mxu0 0.0
    %62 = vmatpush.msra.mxu0 0.0
    %63 = vmatpush.msra.mxu0 0.0
    %64 = vmatpush.msra.mxu0 0.0
    %65 = vmatpush.msra.mxu0 0.0
    %66 = vmatpush.msra.mxu0 0.0
    %v67 = vand.u32 %v50, 4294901760
    %68 = vmatpush.msra.mxu0 %v67
    %v69 = vand.u32 %v46, 4294901760
    %v70 = vsub.f32 %v46, %v69
    %v71 = vand.u32 %v70, 4294901760
    %v72 = vsub.f32 %v70, %v71
    %v73 = vand.u32 %v72, 4294901760
    %74 = vmatmul.f32.gmra.mxu0 %v73
    %v75 = vpop.f32.mrf.mxu0
    %v76 = vadd.f32 %v42, %v75
    %77 = vdwg.mxu0
    %78 = vmatpush.msra.mxu0 0.0
    %79 = vmatpush.msra.mxu0 0.0
    %80 = vmatpush.msra.mxu0 0.0
    %81 = vmatpush.msra.mxu0 0.0
    %82 = vmatpush.msra.mxu0 0.0
    %83 = vmatpush.msra.mxu0 0.0
    %84 = vmatpush.msra.mxu0 0.0
    %85 = vmatpush.msra.mxu0 0.0
    %86 = vmatpush.msra.mxu0 0.0
    %87 = vmatpush.msra.mxu0 0.0
    %88 = vmatpush.msra.mxu0 0.0
    %89 = vmatpush.msra.mxu0 0.0
    %90 = vmatpush.msra.mxu0 0.0
    %91 = vmatpush.msra.mxu0 0.0
    %92 = vmatpush.msra.mxu0 0.0
    %v93 = vand.u32 %v50, 4294901760
    %v94 = vsub.f32 %v50, %v93
    %v95 = vand.u32 %v94, 4294901760
    %v96 = vsub.f32 %v94, %v95
    %v97 = vand.u32 %v96, 4294901760
    %98 = vmatpush.msra.mxu0 %v97
    %v99 = vand.u32 %v46, 4294901760
    %100 = vmatmul.f32.gmra.mxu0 %v99
    %v101 = vpop.f32.mrf.mxu0
    %v102 = vadd.f32 %v76, %v101
    %103 = vdwg.mxu0
    %104 = vmatpush.msra.mxu0 0.0
    %105 = vmatpush.msra.mxu0 0.0
    %106 = vmatpush.msra.mxu0 0.0
    %107 = vmatpush.msra.mxu0 0.0
    %108 = vmatpush.msra.mxu0 0.0
    %109 = vmatpush.msra.mxu0 0.0
    %110 = vmatpush.msra.mxu0 0.0
    %111 = vmatpush.msra.mxu0 0.0
    %112 = vmatpush.msra.mxu0 0.0
    %113 = vmatpush.msra.mxu0 0.0
    %114 = vmatpush.msra.mxu0 0.0
    %115 = vmatpush.msra.mxu0 0.0
    %116 = vmatpush.msra.mxu0 0.0
    %117 = vmatpush.msra.mxu0 0.0
    %118 = vmatpush.msra.mxu0 0.0
    %v119 = vand.u32 %v50, 4294901760
    %v120 = vsub.f32 %v50, %v119
    %121 = vmatpush.msra.mxu0 %v120
    %v122 = vand.u32 %v46, 4294901760
    %v123 = vsub.f32 %v46, %v122
    %124 = vmatmul.f32.gmra.mxu0 %v123
    %v125 = vpop.f32.mrf.mxu0
    %v126 = vadd.f32 %v102, %v125
    %127 = vdwg.mxu0
    %128 = vmatpush.msra.mxu0 0.0
    %129 = vmatpush.msra.mxu0 0.0
    %130 = vmatpush.msra.mxu0 0.0
    %131 = vmatpush.msra.mxu0 0.0
    %132 = vmatpush.msra.mxu0 0.0
    %133 = vmatpush.msra.mxu0 0.0
    %134 = vmatpush.msra.mxu0 0.0
    %135 = vmatpush.msra.mxu0 0.0
    %136 = vmatpush.msra.mxu0 0.0
    %137 = vmatpush.msra.mxu0 0.0
    %138 = vmatpush.msra.mxu0 0.0
    %139 = vmatpush.msra.mxu0 0.0
    %140 = vmatpush.msra.mxu0 0.0
    %141 = vmatpush.msra.mxu0 0.0
    %142 = vmatpush.msra.mxu0 0.0
    %v143 = vand.u32 %v50, 4294901760
    %144 = vmatpush.msra.mxu0 %v143
    %v145 = vand.u32 %v46, 4294901760
    %v146 = vsub.f32 %v46, %v145
    %v147 = vand.u32 %v146, 4294901760
    %148 = vmatmul.f32.gmra.mxu0 %v147
    %v149 = vpop.f32.mrf.mxu0
    %v150 = vadd.f32 %v126, %v149
    %151 = vdwg.mxu0
    %152 = vmatpush.msra.mxu0 0.0
    %153 = vmatpush.msra.mxu0 0.0
    %154 = vmatpush.msra.mxu0 0.0
    %155 = vmatpush.msra.mxu0 0.0
    %156 = vmatpush.msra.mxu0 0.0
    %157 = vmatpush.msra.mxu0 0.0
    %158 = vmatpush.msra.mxu0 0.0
    %159 = vmatpush.msra.mxu0 0.0
    %160 = vmatpush.msra.mxu0 0.0
    %161 = vmatpush.msra.mxu0 0.0
    %162 = vmatpush.msra.mxu0 0.0
    %163 = vmatpush.msra.mxu0 0.0
    %164 = vmatpush.msra.mxu0 0.0
    %165 = vmatpush.msra.mxu0 0.0
    %166 = vmatpush.msra.mxu0 0.0
    %v167 = vand.u32 %v50, 4294901760
    %v168 = vsub.f32 %v50, %v167
    %v169 = vand.u32 %v168, 4294901760
    %170 = vmatpush.msra.mxu0 %v169
    %v171 = vand.u32 %v46, 4294901760
    %172 = vmatmul.f32.gmra.mxu0 %v171
    %v173 = vpop.f32.mrf.mxu0
    %v174 = vadd.f32 %v150, %v173
    %175 = vdwg.mxu0
    %176 = vmatpush.msra.mxu0 0.0
    %177 = vmatpush.msra.mxu0 0.0
    %178 = vmatpush.msra.mxu0 0.0
    %179 = vmatpush.msra.mxu0 0.0
    %180 = vmatpush.msra.mxu0 0.0
    %181 = vmatpush.msra.mxu0 0.0
    %182 = vmatpush.msra.mxu0 0.0
    %183 = vmatpush.msra.mxu0 0.0
    %184 = vmatpush.msra.mxu0 0.0
    %185 = vmatpush.msra.mxu0 0.0
    %186 = vmatpush.msra.mxu0 0.0
    %187 = vmatpush.msra.mxu0 0.0
    %188 = vmatpush.msra.mxu0 0.0
    %189 = vmatpush.msra.mxu0 0.0
    %190 = vmatpush.msra.mxu0 0.0
    %v191 = vand.u32 %v50, 4294901760
    %192 = vmatpush.msra.mxu0 %v191
    %v193 = vand.u32 %v46, 4294901760
    %194 = vmatmul.f32.gmra.mxu0 %v193
    %v195 = vpop.f32.mrf.mxu0
    %v196 = vadd.f32 %v174, %v195
    %197 = vdwg.mxu0
    %v198 = vmax.f32 %v196, 0.0
    %v199 = vld [vmem:[#allocation2] sm:$0xff]
    %v200 = vld [vmem:[#allocation2 + $0x8] sm:$0xff]
    %v201 = vld [vmem:[#allocation2 + $0x10] sm:$0xff]
    %v202 = vld [vmem:[#allocation2 + $0x18] sm:$0xff]
    %v203 = vld [vmem:[#allocation2 + $0x20] sm:$0xff]
    %v204 = vld [vmem:[#allocation2 + $0x28] sm:$0xff]
    %v205 = vld [vmem:[#allocation2 + $0x30] sm:$0xff]
    %v206 = vld [vmem:[#allocation2 + $0x38] sm:$0xff]
    %v207 = vld [vmem:[#allocation2 + $0x40] sm:$0xff]
    %v208 = vld [vmem:[#allocation2 + $0x48] sm:$0xff]
    %v209 = vld [vmem:[#allocation2 + $0x50] sm:$0xff]
    %v210 = vld [vmem:[#allocation2 + $0x58] sm:$0xff]
    %v211 = vld [vmem:[#allocation2 + $0x60] sm:$0xff]
    %v212 = vld [vmem:[#allocation2 + $0x68] sm:$0xff]
    %v213 = vld [vmem:[#allocation2 + $0x70] sm:$0xff]
    %v214 = vld [vmem:[#allocation2 + $0x78] sm:$0xff]
    %v215 = vld [vmem:[%s4] sm:$0x1]
    %v217 = vperm.slane %v215, 0
    %v219 = vand.u32 %v214, 4294901760
    %220 = vmatpush.msra.mxu0 %v219
    %v221 = vand.u32 %v213, 4294901760
    %222 = vmatpush.msra.mxu0 %v221
    %v223 = vand.u32 %v212, 4294901760
    %224 = vmatpush.msra.mxu0 %v223
    %v225 = vand.u32 %v211, 4294901760
    %226 = vmatpush.msra.mxu0 %v225
    %v227 = vand.u32 %v210, 4294901760
    %228 = vmatpush.msra.mxu0 %v227
    %v229 = vand.u32 %v209, 4294901760
    %230 = vmatpush.msra.mxu0 %v229
    %v231 = vand.u32 %v208, 4294901760
    %232 = vmatpush.msra.mxu0 %v231
    %v233 = vand.u32 %v207, 4294901760
    %234 = vmatpush.msra.mxu0 %v233
    %v235 = vand.u32 %v206, 4294901760
    %236 = vmatpush.msra.mxu0 %v235
    %v237 = vand.u32 %v205, 4294901760
    %238 = vmatpush.msra.mxu0 %v237
    %v239 = vand.u32 %v204, 4294901760
    %240 = vmatpush.msra.mxu0 %v239
    %v241 = vand.u32 %v203, 4294901760
    %242 = vmatpush.msra.mxu0 %v241
    %v243 = vand.u32 %v202, 4294901760
    %244 = vmatpush.msra.mxu0 %v243
    %v245 = vand.u32 %v201, 4294901760
    %246 = vmatpush.msra.mxu0 %v245
    %v247 = vand.u32 %v200, 4294901760
    %248 = vmatpush.msra.mxu0 %v247
    %v249 = vand.u32 %v199, 4294901760
    %250 = vmatpush.msra.mxu0 %v249
    %v251 = vand.u32 %v198, 4294901760
    %v252 = vsub.f32 %v198, %v251
    %v253 = vand.u32 %v252, 4294901760
    %v254 = vsub.f32 %v252, %v253
    %v255 = vand.u32 %v254, 4294901760
    %256 = vmatmul.f32.gmra.mxu0 %v255
    %v257 = vpop.f32.mrf.mxu0
    %v258 = vadd.f32 %v217, %v257
    %259 = vdwg.mxu0
    %v260 = vand.u32 %v214, 4294901760
    %v261 = vsub.f32 %v214, %v260
    %v262 = vand.u32 %v261, 4294901760
    %v263 = vsub.f32 %v261, %v262
    %v264 = vand.u32 %v263, 4294901760
    %265 = vmatpush.msra.mxu0 %v264
    %v266 = vand.u32 %v213, 4294901760
    %v267 = vsub.f32 %v213, %v266
    %v268 = vand.u32 %v267, 4294901760
    %v269 = vsub.f32 %v267, %v268
    %v270 = vand.u32 %v269, 4294901760
    %271 = vmatpush.msra.mxu0 %v270
    %v272 = vand.u32 %v212, 4294901760
    %v273 = vsub.f32 %v212, %v272
    %v274 = vand.u32 %v273, 4294901760
    %v275 = vsub.f32 %v273, %v274
    %v276 = vand.u32 %v275, 4294901760
    %277 = vmatpush.msra.mxu0 %v276
    %v278 = vand.u32 %v211, 4294901760
    %v279 = vsub.f32 %v211, %v278
    %v280 = vand.u32 %v279, 4294901760
    %v281 = vsub.f32 %v279, %v280
    %v282 = vand.u32 %v281, 4294901760
    %283 = vmatpush.msra.mxu0 %v282
    %v284 = vand.u32 %v210, 4294901760
    %v285 = vsub.f32 %v210, %v284
    %v286 = vand.u32 %v285, 4294901760
    %v287 = vsub.f32 %v285, %v286
    %v288 = vand.u32 %v287, 4294901760
    %289 = vmatpush.msra.mxu0 %v288
    %v290 = vand.u32 %v209, 4294901760
    %v291 = vsub.f32 %v209, %v290
    %v292 = vand.u32 %v291, 4294901760
    %v293 = vsub.f32 %v291, %v292
    %v294 = vand.u32 %v293, 4294901760
    %295 = vmatpush.msra.mxu0 %v294
    %v296 = vand.u32 %v208, 4294901760
    %v297 = vsub.f32 %v208, %v296
    %v298 = vand.u32 %v297, 4294901760
    %v299 = vsub.f32 %v297, %v298
    %v300 = vand.u32 %v299, 4294901760
    %301 = vmatpush.msra.mxu0 %v300
    %v302 = vand.u32 %v207, 4294901760
    %v303 = vsub.f32 %v207, %v302
    %v304 = vand.u32 %v303, 4294901760
    %v305 = vsub.f32 %v303, %v304
    %v306 = vand.u32 %v305, 4294901760
    %307 = vmatpush.msra.mxu0 %v306
    %v308 = vand.u32 %v206, 4294901760
    %v309 = vsub.f32 %v206, %v308
    %v310 = vand.u32 %v309, 4294901760
    %v311 = vsub.f32 %v309, %v310
    %v312 = vand.u32 %v311, 4294901760
    %313 = vmatpush.msra.mxu0 %v312
    %v314 = vand.u32 %v205, 4294901760
    %v315 = vsub.f32 %v205, %v314
    %v316 = vand.u32 %v315, 4294901760
    %v317 = vsub.f32 %v315, %v316
    %v318 = vand.u32 %v317, 4294901760
    %319 = vmatpush.msra.mxu0 %v318
    %v320 = vand.u32 %v204, 4294901760
    %v321 = vsub.f32 %v204, %v320
    %v322 = vand.u32 %v321, 4294901760
    %v323 = vsub.f32 %v321, %v322
    %v324 = vand.u32 %v323, 4294901760
    %325 = vmatpush.msra.mxu0 %v324
    %v326 = vand.u32 %v203, 4294901760
    %v327 = vsub.f32 %v203, %v326
    %v328 = vand.u32 %v327, 4294901760
    %v329 = vsub.f32 %v327, %v328
    %v330 = vand.u32 %v329, 4294901760
    %331 = vmatpush.msra.mxu0 %v330
    %v332 = vand.u32 %v202, 4294901760
    %v333 = vsub.f32 %v202, %v332
    %v334 = vand.u32 %v333, 4294901760
    %v335 = vsub.f32 %v333, %v334
    %v336 = vand.u32 %v335, 4294901760
    %337 = vmatpush.msra.mxu0 %v336
    %v338 = vand.u32 %v201, 4294901760
    %v339 = vsub.f32 %v201, %v338
    %v340 = vand.u32 %v339, 4294901760
    %v341 = vsub.f32 %v339, %v340
    %v342 = vand.u32 %v341, 4294901760
    %343 = vmatpush.msra.mxu0 %v342
    %v344 = vand.u32 %v200, 4294901760
    %v345 = vsub.f32 %v200, %v344
    %v346 = vand.u32 %v345, 4294901760
    %v347 = vsub.f32 %v345, %v346
    %v348 = vand.u32 %v347, 4294901760
    %349 = vmatpush.msra.mxu0 %v348
    %v350 = vand.u32 %v199, 4294901760
    %v351 = vsub.f32 %v199, %v350
    %v352 = vand.u32 %v351, 4294901760
    %v353 = vsub.f32 %v351, %v352
    %v354 = vand.u32 %v353, 4294901760
    %355 = vmatpush.msra.mxu0 %v354
    %v356 = vand.u32 %v198, 4294901760
    %357 = vmatmul.f32.gmra.mxu0 %v356
    %v358 = vpop.f32.mrf.mxu0
    %v359 = vadd.f32 %v258, %v358
    %360 = vdwg.mxu0
    %v361 = vand.u32 %v214, 4294901760
    %v362 = vsub.f32 %v214, %v361
    %363 = vmatpush.msra.mxu0 %v362
    %v364 = vand.u32 %v213, 4294901760
    %v365 = vsub.f32 %v213, %v364
    %366 = vmatpush.msra.mxu0 %v365
    %v367 = vand.u32 %v212, 4294901760
    %v368 = vsub.f32 %v212, %v367
    %369 = vmatpush.msra.mxu0 %v368
    %v370 = vand.u32 %v211, 4294901760
    %v371 = vsub.f32 %v211, %v370
    %372 = vmatpush.msra.mxu0 %v371
    %v373 = vand.u32 %v210, 4294901760
    %v374 = vsub.f32 %v210, %v373
    %375 = vmatpush.msra.mxu0 %v374
    %v376 = vand.u32 %v209, 4294901760
    %v377 = vsub.f32 %v209, %v376
    %378 = vmatpush.msra.mxu0 %v377
    %v379 = vand.u32 %v208, 4294901760
    %v380 = vsub.f32 %v208, %v379
    %381 = vmatpush.msra.mxu0 %v380
    %v382 = vand.u32 %v207, 4294901760
    %v383 = vsub.f32 %v207, %v382
    %384 = vmatpush.msra.mxu0 %v383
    %v385 = vand.u32 %v206, 4294901760
    %v386 = vsub.f32 %v206, %v385
    %387 = vmatpush.msra.mxu0 %v386
    %v388 = vand.u32 %v205, 4294901760
    %v389 = vsub.f32 %v205, %v388
    %390 = vmatpush.msra.mxu0 %v389
    %v391 = vand.u32 %v204, 4294901760
    %v392 = vsub.f32 %v204, %v391
    %393 = vmatpush.msra.mxu0 %v392
    %v394 = vand.u32 %v203, 4294901760
    %v395 = vsub.f32 %v203, %v394
    %396 = vmatpush.msra.mxu0 %v395
    %v397 = vand.u32 %v202, 4294901760
    %v398 = vsub.f32 %v202, %v397
    %399 = vmatpush.msra.mxu0 %v398
    %v400 = vand.u32 %v201, 4294901760
    %v401 = vsub.f32 %v201, %v400
    %402 = vmatpush.msra.mxu0 %v401
    %v403 = vand.u32 %v200, 4294901760
    %v404 = vsub.f32 %v200, %v403
    %405 = vmatpush.msra.mxu0 %v404
    %v406 = vand.u32 %v199, 4294901760
    %v407 = vsub.f32 %v199, %v406
    %408 = vmatpush.msra.mxu0 %v407
    %v409 = vand.u32 %v198, 4294901760
    %v410 = vsub.f32 %v198, %v409
    %411 = vmatmul.f32.gmra.mxu0 %v410
    %v412 = vpop.f32.mrf.mxu0
    %v413 = vadd.f32 %v359, %v412
    %414 = vdwg.mxu0
    %v415 = vand.u32 %v214, 4294901760
    %416 = vmatpush.msra.mxu0 %v415
    %v417 = vand.u32 %v213, 4294901760
    %418 = vmatpush.msra.mxu0 %v417
    %v419 = vand.u32 %v212, 4294901760
    %420 = vmatpush.msra.mxu0 %v419
    %v421 = vand.u32 %v211, 4294901760
    %422 = vmatpush.msra.mxu0 %v421
    %v423 = vand.u32 %v210, 4294901760
    %424 = vmatpush.msra.mxu0 %v423
    %v425 = vand.u32 %v209, 4294901760
    %426 = vmatpush.msra.mxu0 %v425
    %v427 = vand.u32 %v208, 4294901760
    %428 = vmatpush.msra.mxu0 %v427
    %v429 = vand.u32 %v207, 4294901760
    %430 = vmatpush.msra.mxu0 %v429
    %v431 = vand.u32 %v206, 4294901760
    %432 = vmatpush.msra.mxu0 %v431
    %v433 = vand.u32 %v205, 4294901760
    %434 = vmatpush.msra.mxu0 %v433
    %v435 = vand.u32 %v204, 4294901760
    %436 = vmatpush.msra.mxu0 %v435
    %v437 = vand.u32 %v203, 4294901760
    %438 = vmatpush.msra.mxu0 %v437
    %v439 = vand.u32 %v202, 4294901760
    %440 = vmatpush.msra.mxu0 %v439
    %v441 = vand.u32 %v201, 4294901760
    %442 = vmatpush.msra.mxu0 %v441
    %v443 = vand.u32 %v200, 4294901760
    %444 = vmatpush.msra.mxu0 %v443
    %v445 = vand.u32 %v199, 4294901760
    %446 = vmatpush.msra.mxu0 %v445
    %v447 = vand.u32 %v198, 4294901760
    %v448 = vsub.f32 %v198, %v447
    %v449 = vand.u32 %v448, 4294901760
    %450 = vmatmul.f32.gmra.mxu0 %v449
    %v451 = vpop.f32.mrf.mxu0
    %v452 = vadd.f32 %v413, %v451
    %453 = vdwg.mxu0
    %v454 = vand.u32 %v214, 4294901760
    %v455 = vsub.f32 %v214, %v454
    %v456 = vand.u32 %v455, 4294901760
    %457 = vmatpush.msra.mxu0 %v456
    %v458 = vand.u32 %v213, 4294901760
    %v459 = vsub.f32 %v213, %v458
    %v460 = vand.u32 %v459, 4294901760
    %461 = vmatpush.msra.mxu0 %v460
    %v462 = vand.u32 %v212, 4294901760
    %v463 = vsub.f32 %v212, %v462
    %v464 = vand.u32 %v463, 4294901760
    %465 = vmatpush.msra.mxu0 %v464
    %v466 = vand.u32 %v211, 4294901760
    %v467 = vsub.f32 %v211, %v466
    %v468 = vand.u32 %v467, 4294901760
    %469 = vmatpush.msra.mxu0 %v468
    %v470 = vand.u32 %v210, 4294901760
    %v471 = vsub.f32 %v210, %v470
    %v472 = vand.u32 %v471, 4294901760
    %473 = vmatpush.msra.mxu0 %v472
    %v474 = vand.u32 %v209, 4294901760
    %v475 = vsub.f32 %v209, %v474
    %v476 = vand.u32 %v475, 4294901760
    %477 = vmatpush.msra.mxu0 %v476
    %v478 = vand.u32 %v208, 4294901760
    %v479 = vsub.f32 %v208, %v478
    %v480 = vand.u32 %v479, 4294901760
    %481 = vmatpush.msra.mxu0 %v480
    %v482 = vand.u32 %v207, 4294901760
    %v483 = vsub.f32 %v207, %v482
    %v484 = vand.u32 %v483, 4294901760
    %485 = vmatpush.msra.mxu0 %v484
    %v486 = vand.u32 %v206, 4294901760
    %v487 = vsub.f32 %v206, %v486
    %v488 = vand.u32 %v487, 4294901760
    %489 = vmatpush.msra.mxu0 %v488
    %v490 = vand.u32 %v205, 4294901760
    %v491 = vsub.f32 %v205, %v490
    %v492 = vand.u32 %v491, 4294901760
    %493 = vmatpush.msra.mxu0 %v492
    %v494 = vand.u32 %v204, 4294901760
    %v495 = vsub.f32 %v204, %v494
    %v496 = vand.u32 %v495, 4294901760
    %497 = vmatpush.msra.mxu0 %v496
    %v498 = vand.u32 %v203, 4294901760
    %v499 = vsub.f32 %v203, %v498
    %v500 = vand.u32 %v499, 4294901760
    %501 = vmatpush.msra.mxu0 %v500
    %v502 = vand.u32 %v202, 4294901760
    %v503 = vsub.f32 %v202, %v502
    %v504 = vand.u32 %v503, 4294901760
    %505 = vmatpush.msra.mxu0 %v504
    %v506 = vand.u32 %v201, 4294901760
    %v507 = vsub.f32 %v201, %v506
    %v508 = vand.u32 %v507, 4294901760
    %509 = vmatpush.msra.mxu0 %v508
    %v510 = vand.u32 %v200, 4294901760
    %v511 = vsub.f32 %v200, %v510
    %v512 = vand.u32 %v511, 4294901760
    %513 = vmatpush.msra.mxu0 %v512
    %v514 = vand.u32 %v199, 4294901760
    %v515 = vsub.f32 %v199, %v514
    %v516 = vand.u32 %v515, 4294901760
    %517 = vmatpush.msra.mxu0 %v516
    %v518 = vand.u32 %v198, 4294901760
    %519 = vmatmul.f32.gmra.mxu0 %v518
    %v520 = vpop.f32.mrf.mxu0
    %v521 = vadd.f32 %v452, %v520
    %522 = vdwg.mxu0
    %v523 = vand.u32 %v214, 4294901760
    %524 = vmatpush.msra.mxu0 %v523
    %v525 = vand.u32 %v213, 4294901760
    %526 = vmatpush.msra.mxu0 %v525
    %v527 = vand.u32 %v212, 4294901760
    %528 = vmatpush.msra.mxu0 %v527
    %v529 = vand.u32 %v211, 4294901760
    %530 = vmatpush.msra.mxu0 %v529
    %v531 = vand.u32 %v210, 4294901760
    %532 = vmatpush.msra.mxu0 %v531
    %v533 = vand.u32 %v209, 4294901760
    %534 = vmatpush.msra.mxu0 %v533
    %v535 = vand.u32 %v208, 4294901760
    %536 = vmatpush.msra.mxu0 %v535
    %v537 = vand.u32 %v207, 4294901760
    %538 = vmatpush.msra.mxu0 %v537
    %v539 = vand.u32 %v206, 4294901760
    %540 = vmatpush.msra.mxu0 %v539
    %v541 = vand.u32 %v205, 4294901760
    %542 = vmatpush.msra.mxu0 %v541
    %v543 = vand.u32 %v204, 4294901760
    %544 = vmatpush.msra.mxu0 %v543
    %v545 = vand.u32 %v203, 4294901760
    %546 = vmatpush.msra.mxu0 %v545
    %v547 = vand.u32 %v202, 4294901760
    %548 = vmatpush.msra.mxu0 %v547
    %v549 = vand.u32 %v201, 4294901760
    %550 = vmatpush.msra.mxu0 %v549
    %v551 = vand.u32 %v200, 4294901760
    %552 = vmatpush.msra.mxu0 %v551
    %v553 = vand.u32 %v199, 4294901760
    %554 = vmatpush.msra.mxu0 %v553
    %v555 = vand.u32 %v198, 4294901760
    %556 = vmatmul.f32.gmra.mxu0 %v555
    %v557 = vpop.f32.mrf.mxu0
    %v558 = vadd.f32 %v521, %v557
    %559 = vdwg.mxu0
    %v560 = vlaneseq
    %v561 = vand.u32 %v560, 127
    %vm562 = vcmp.lt.s32.totalorder %v561, 4
    %v563 = vsel %vm562, 1, 0
    %vm564 = vcmp.eq.s32.totalorder %v563, 1
    %v565 = vsel %vm564, %v558, -inf
    %566 = vmax.xlane.f32.xlu0 %v565
    %v567 = vpop.xlane.xlu0 %566
    %v568 = vsub.f32 %v565, %v567
    %v569 = vmul.f32 %v568, 1.442695
    %v570 = vpow.pop %v569
    %571 = vadd.xlane.f32.xlu0 %v570
    %v572 = vpop.xlane.xlu0 %571
    %v573 = vrcp.pop %v572
    %v574 = vmul.f32 %v572, %v573
    %v575 = vsub.f32 1.0, %v574
    %v576 = vmul.f32 %v573, %v575
    %v577 = vadd.f32 %v573, %v576
    %vm578 = vweird.f32 %v572
    %vm579 = vweird.f32 %v573
    %vm580 = vmor %vm578, %vm579
    %v581 = vsel %vm580, %v573, %v577
    %v582 = vand.u32 2147483647, %v572
    %vm583 = vcmp.eq.f32.partialorder %v582, 8.507059e+37
    %v584 = vand.u32 %v572, 2147483648
    %v585 = vor.u32 1.1754944e-38, %v584
    %v586 = vsel %vm583, %v585, %v581
    %v587 = vmul.f32 %v570, %v586
    %588 = vst.msk [vmem:[%s5] sm:$0xff] %vm44, %v587
    %590 = vrot.lane.b32.xlu0 %v558, 124
    %v591 = vpop.permute.xlu0 %590
    %vm593 = vcmask 7168
    %594 = vst.msk [vmem:[%s6] sm:$0xff] %vm593, %v591
    // Predicated region
    $region26: #{tpu_custom_call.1} parent=1 // pred_check
      _
    $region27: #{tpu_custom_call.1} parent=1 // pred_check_branch
      %596 = sbr.rel (0) target = $region29
    $region28: #{tpu_custom_call.1} parent=1 // pred_region
      _
    $region29: #{tpu_custom_call.1} parent=1 // pred_fallthru
      _
    // Predicated region
    $region30: #{tpu_custom_call.1} parent=1 // pred_check
      _
    $region31: #{tpu_custom_call.1} parent=1 // pred_check_branch
      %598 = sbr.rel (0) target = $region33
    $region32: #{tpu_custom_call.1} parent=1 // pred_region
      _
    $region33: #{tpu_custom_call.1} parent=1 // pred_fallthru
      _
    // Predicated region
    $region34: #{tpu_custom_call.1} parent=1 // pred_check
      _
    $region35: #{tpu_custom_call.1} parent=1 // pred_check_branch
      %600 = sbr.rel (0) target = $region37
    $region36: #{tpu_custom_call.1} parent=1 // pred_region
      _
    $region37: #{tpu_custom_call.1} parent=1 // pred_fallthru
      _
    // Predicated region
    $region38: #{tpu_custom_call.1} parent=1 // pred_check
      _
    $region39: #{tpu_custom_call.1} parent=1 // pred_check_branch
      %602 = sbr.rel (0) target = $region41
    $region40: #{tpu_custom_call.1} parent=1 // pred_region
      _
    $region41: #{tpu_custom_call.1} parent=1 // pred_fallthru
      _
    %603 = vsyncpa [#allocation3], 1

</llo_original>
